<compile_context>
chip_gen: v7x
topology: tpu7x:2x2x1
jax: 0.10.0
libtpu: 0.0.40
codegen_flags: <defaults>
</compile_context>

<pallas_src>
import functools

import jax
import jax.numpy as jnp
from jax.experimental import pallas as pl
from jax.experimental.pallas import tpu as pltpu

_LANE = 128   # TPU lane width (last dim)
_SUB = 8      # TPU sublane width (second-to-last dim)


def _round_up(n, m):
    return ((n + m - 1) // m) * m


def _ode_func_kernel(y_ref, w1_ref, b1_ref, w2_ref, b2_ref, w3_ref, b3_ref,
                     o_ref, *, mxu_dtype):
    """Fused 3-layer MLP with tanh nonlinearities (the ODE gradient net).

    All feature dims are already padded to multiples of 128 lanes by the
    wrapper, so every dot / store is lane-dense.  Accumulation is f32; tanh and
    bias adds stay in f32 (safe on v5e which has no bf16 VPU/EUP path).
    """
    def mm(a, w_ref):
        a_in = a.astype(mxu_dtype) if mxu_dtype is not None else a
        return jnp.dot(a_in, w_ref[...], preferred_element_type=jnp.float32)

    y = y_ref[...]
    h = jnp.tanh(mm(y, w1_ref) + b1_ref[...])
    h = jnp.tanh(mm(h, w2_ref) + b2_ref[...])
    g = mm(h, w3_ref) + b3_ref[...]          # negation already folded into W3/b3
    o_ref[...] = g.astype(o_ref.dtype)


def ode_func_forward(t_local, y, params, *, backwards=False, tile_b=256,
                     mxu_dtype=None):
    """Pallas equivalent of ODEFunc.forward(t_local, y, backwards).

    t_local is unused (matches get_ode_gradient_nn which ignores time).
    y: (batch, latent) float32.
    params: (W1, b1, W2, b2, W3, b3) with W_i shaped (in_dim, out_dim).
    mxu_dtype: e.g. jnp.bfloat16 on v6e/v7x to feed the MXU natively (f32 acc).
    """
    del t_local  # the gradient net does not use time
    w1, b1, w2, b2, w3, b3 = params
    batch, latent = y.shape
    units = w1.shape[1]

    # Fold the `backwards` sign flip into the last layer (free, no kernel work).
    if backwards:
        w3, b3 = -w3, -b3

    latent_p = _round_up(latent, _LANE)
    units_p = _round_up(units, _LANE)

    def pad2(a, rows, cols):
        a = a.reshape((-1, a.shape[-1]))
        return jnp.pad(a, ((0, rows - a.shape[0]), (0, cols - a.shape[1])))

    w_dtype = mxu_dtype if mxu_dtype is not None else w1.dtype
    w1p = pad2(w1, latent_p, units_p).astype(w_dtype)
    w2p = pad2(w2, units_p, units_p).astype(w_dtype)
    w3p = pad2(w3, units_p, latent_p).astype(w_dtype)
    b1p = pad2(b1, 1, units_p).astype(jnp.float32)
    b2p = pad2(b2, 1, units_p).astype(jnp.float32)
    b3p = pad2(b3, 1, latent_p).astype(jnp.float32)

    # Batch tiling: one big tile (up to tile_b rows), padded so the grid divides
    # evenly.  Padded rows/lanes are zeros and are sliced away afterwards.
    tb = _round_up(min(tile_b, _round_up(batch, _SUB)), _SUB)
    batch_p = _round_up(batch, tb)
    y_p = pad2(y, batch_p, latent_p)

    grid = (batch_p // tb,)
    const = lambda i: (0, 0)  # weights/biases: same block at every grid step
    # NOTE: constant-index blocks are not re-DMA'd between steps; at these sizes
    # (<=128x128 f32) VMEM is nowhere near the limit even on v7x's 64 MiB.

    kernel = functools.partial(_ode_func_kernel, mxu_dtype=mxu_dtype)

    out = pl.pallas_call(
        kernel,
        out_shape=jax.ShapeDtypeStruct((batch_p, latent_p), y.dtype),
        grid_spec=pltpu.PrefetchScalarGridSpec(
            num_scalar_prefetch=0,
            grid=grid,
            in_specs=[
                pl.BlockSpec((tb, latent_p), lambda i: (i, 0)),      # y tile
                pl.BlockSpec((latent_p, units_p), const),            # W1
                pl.BlockSpec((1, units_p), const),                   # b1
                pl.BlockSpec((units_p, units_p), const),             # W2
                pl.BlockSpec((1, units_p), const),                   # b2
                pl.BlockSpec((units_p, latent_p), const),            # W3
                pl.BlockSpec((1, latent_p), const),                  # b3
            ],
            out_specs=pl.BlockSpec((tb, latent_p), lambda i: (i, 0)),
        ),
        compiler_params=pltpu.CompilerParams(
            # batch-tile axis is independent -> shards across v7x's two TCs
            # whenever the grid has >= 2 steps.
            dimension_semantics=("parallel",)),
    )(y_p, w1p, b1p, w2p, b2p, w3p, b3p)

    return out[:batch, :latent]


def init_ode_func_params(key, latent_dim, units, dtype=jnp.float32):
    """Deterministic init matching utils.init_network_weights:
       weights ~ Normal(0, 0.1), biases = 0."""
    k1, k2, k3 = jax.random.split(key, 3)
    std = 0.1
    w1 = (std * jax.random.normal(k1, (latent_dim, units))).astype(dtype)
    w2 = (std * jax.random.normal(k2, (units, units))).astype(dtype)
    w3 = (std * jax.random.normal(k3, (units, latent_dim))).astype(dtype)
    b1 = jnp.zeros((1, units), dtype)
    b2 = jnp.zeros((1, units), dtype)
    b3 = jnp.zeros((1, latent_dim), dtype)
    return (w1, b1, w2, b2, w3, b3)


def _reference_forward(y, params, backwards=False):
    w1, b1, w2, b2, w3, b3 = params
    h = jnp.tanh(y @ w1 + b1)
    h = jnp.tanh(h @ w2 + b2)
    g = h @ w3 + b3
    return -g if backwards else g


if __name__ == "__main__":
    batch, latent_dim, units = 16, 32, 64

    key = jax.random.PRNGKey(0)
    key_y, key_p = jax.random.split(key)
    y = jax.random.normal(key_y, (batch, latent_dim), dtype=jnp.float32)
    t_local = jnp.float32(0.5)  # unused by the gradient net, kept for API parity
    params = init_ode_func_params(key_p, latent_dim, units)

    # Keep the call under jit so repeated ODE-solver evaluations amortize
    # dispatch; backwards / tile sizes are baked in at trace time.
    fwd = jax.jit(functools.partial(ode_func_forward, backwards=False))
    bwd = jax.jit(functools.partial(ode_func_forward, backwards=True))

    grad = jax.block_until_ready(fwd(t_local, y, params))
    grad_bwd = jax.block_until_ready(bwd(t_local, y, params))

    # sanity check against a plain-JAX reference
    ref = _reference_forward(y, params, backwards=False)
    ref_bwd = _reference_forward(y, params, backwards=True)
    assert grad.shape == (batch, latent_dim)
    assert jnp.allclose(grad, ref, atol=1e-5, rtol=1e-5)
    assert jnp.allclose(grad_bwd, ref_bwd, atol=1e-5, rtol=1e-5)

    # bf16-MXU path (the v6e/v7x recommendation): looser tolerance, f32 accum.
    grad_bf16 = jax.block_until_ready(
        ode_func_forward(t_local, y, params, mxu_dtype=jnp.bfloat16))
    assert jnp.allclose(grad_bf16, ref, atol=1e-1, rtol=1e-1)

    print("KERNEL_OK")
</pallas_src>

<mosaic_0001>
module attributes {stable_mosaic.version = 11 : i64} {
  func.func @_ode_func_kernel(%arg0: i32, %arg1: memref<16x128xf32, #tpu.memory_space<vmem>>, %arg2: memref<128x128xf32, #tpu.memory_space<vmem>>, %arg3: memref<1x128xf32, #tpu.memory_space<vmem>>, %arg4: memref<128x128xf32, #tpu.memory_space<vmem>>, %arg5: memref<1x128xf32, #tpu.memory_space<vmem>>, %arg6: memref<128x128xf32, #tpu.memory_space<vmem>>, %arg7: memref<1x128xf32, #tpu.memory_space<vmem>>, %arg8: memref<16x128xf32, #tpu.memory_space<vmem>>) attributes {dimension_semantics = [#tpu.dimension_semantics<parallel>], iteration_bounds = array<i64: 1>, scalar_prefetch = 0 : i64, scratch_operands = 0 : i64, tpu.core_type = #tpu.core_type<tc>, window_params = [{transform_indices = @transform_0, window_bounds = array<i64: 16, 128>}, {pipeline_mode = #tpu.pipeline_mode<synchronous>, transform_indices = @transform_1, window_bounds = array<i64: 128, 128>}, {pipeline_mode = #tpu.pipeline_mode<synchronous>, transform_indices = @transform_2, window_bounds = array<i64: 1, 128>}, {pipeline_mode = #tpu.pipeline_mode<synchronous>, transform_indices = @transform_3, window_bounds = array<i64: 128, 128>}, {pipeline_mode = #tpu.pipeline_mode<synchronous>, transform_indices = @transform_4, window_bounds = array<i64: 1, 128>}, {pipeline_mode = #tpu.pipeline_mode<synchronous>, transform_indices = @transform_5, window_bounds = array<i64: 128, 128>}, {pipeline_mode = #tpu.pipeline_mode<synchronous>, transform_indices = @transform_6, window_bounds = array<i64: 1, 128>}, {transform_indices = @transform_7, window_bounds = array<i64: 16, 128>}]} {
    %c0 = arith.constant 0 : index
    %c0_0 = arith.constant 0 : index
    %0 = vector.load %arg1[%c0, %c0_0] : memref<16x128xf32, #tpu.memory_space<vmem>>, vector<16x128xf32>
    %c0_1 = arith.constant 0 : index
    %c0_2 = arith.constant 0 : index
    %1 = vector.load %arg2[%c0_1, %c0_2] : memref<128x128xf32, #tpu.memory_space<vmem>>, vector<128x128xf32>
    %cst = arith.constant dense<0.000000e+00> : vector<16x128xf32>
    %2 = tpu.matmul %0, %1, %cst {dimension_numbers = #tpu.dot_dimension_numbers<[1], [0], [0], [1], [0, 0, 1, 1], [], []>} : vector<16x128xf32>, vector<128x128xf32>, vector<16x128xf32> -> vector<16x128xf32>
    %c0_3 = arith.constant 0 : index
    %c0_4 = arith.constant 0 : index
    %3 = vector.load %arg3[%c0_3, %c0_4] : memref<1x128xf32, #tpu.memory_space<vmem>>, vector<1x128xf32>
    %4 = vector.broadcast %3 : vector<1x128xf32> to vector<16x128xf32>
    %5 = arith.addf %2, %4 : vector<16x128xf32>
    %6 = math.tanh %5 : vector<16x128xf32>
    %c0_5 = arith.constant 0 : index
    %c0_6 = arith.constant 0 : index
    %7 = vector.load %arg4[%c0_5, %c0_6] : memref<128x128xf32, #tpu.memory_space<vmem>>, vector<128x128xf32>
    %cst_7 = arith.constant dense<0.000000e+00> : vector<16x128xf32>
    %8 = tpu.matmul %6, %7, %cst_7 {dimension_numbers = #tpu.dot_dimension_numbers<[1], [0], [0], [1], [0, 0, 1, 1], [], []>} : vector<16x128xf32>, vector<128x128xf32>, vector<16x128xf32> -> vector<16x128xf32>
    %c0_8 = arith.constant 0 : index
    %c0_9 = arith.constant 0 : index
    %9 = vector.load %arg5[%c0_8, %c0_9] : memref<1x128xf32, #tpu.memory_space<vmem>>, vector<1x128xf32>
    %10 = vector.broadcast %9 : vector<1x128xf32> to vector<16x128xf32>
    %11 = arith.addf %8, %10 : vector<16x128xf32>
    %12 = math.tanh %11 : vector<16x128xf32>
    %c0_10 = arith.constant 0 : index
    %c0_11 = arith.constant 0 : index
    %13 = vector.load %arg6[%c0_10, %c0_11] : memref<128x128xf32, #tpu.memory_space<vmem>>, vector<128x128xf32>
    %cst_12 = arith.constant dense<0.000000e+00> : vector<16x128xf32>
    %14 = tpu.matmul %12, %13, %cst_12 {dimension_numbers = #tpu.dot_dimension_numbers<[1], [0], [0], [1], [0, 0, 1, 1], [], []>} : vector<16x128xf32>, vector<128x128xf32>, vector<16x128xf32> -> vector<16x128xf32>
    %c0_13 = arith.constant 0 : index
    %c0_14 = arith.constant 0 : index
    %15 = vector.load %arg7[%c0_13, %c0_14] : memref<1x128xf32, #tpu.memory_space<vmem>>, vector<1x128xf32>
    %16 = vector.broadcast %15 : vector<1x128xf32> to vector<16x128xf32>
    %17 = arith.addf %14, %16 : vector<16x128xf32>
    %c0_15 = arith.constant 0 : index
    %c0_16 = arith.constant 0 : index
    %18 = vector.load %arg8[%c0_15, %c0_16] : memref<16x128xf32, #tpu.memory_space<vmem>>, vector<16x128xf32>
    tpu.vector_store %arg8[%c0_15, %c0_16], %17 {strides = array<i32>} : memref<16x128xf32, #tpu.memory_space<vmem>>, vector<16x128xf32>,
    return
  }
  func.func @transform_0(%arg0: i32) -> (i32, i32) {
    %c0_i32 = arith.constant 0 : i32
    %c0_i32_0 = arith.constant 0 : i32
    return %arg0, %c0_i32 : i32, i32
  }
  func.func @transform_1(%arg0: i32) -> (i32, i32) {
    %c0_i32 = arith.constant 0 : i32
    %c0_i32_0 = arith.constant 0 : i32
    %c0_i32_1 = arith.constant 0 : i32
    return %c0_i32, %c0_i32_0 : i32, i32
  }
  func.func @transform_2(%arg0: i32) -> (i32, i32) {
    %c0_i32 = arith.constant 0 : i32
    %c0_i32_0 = arith.constant 0 : i32
    %c0_i32_1 = arith.constant 0 : i32
    return %c0_i32, %c0_i32_0 : i32, i32
  }
  func.func @transform_3(%arg0: i32) -> (i32, i32) {
    %c0_i32 = arith.constant 0 : i32
    %c0_i32_0 = arith.constant 0 : i32
    %c0_i32_1 = arith.constant 0 : i32
    return %c0_i32, %c0_i32_0 : i32, i32
  }
  func.func @transform_4(%arg0: i32) -> (i32, i32) {
    %c0_i32 = arith.constant 0 : i32
    %c0_i32_0 = arith.constant 0 : i32
    %c0_i32_1 = arith.constant 0 : i32
    return %c0_i32, %c0_i32_0 : i32, i32
  }
  func.func @transform_5(%arg0: i32) -> (i32, i32) {
    %c0_i32 = arith.constant 0 : i32
    %c0_i32_0 = arith.constant 0 : i32
    %c0_i32_1 = arith.constant 0 : i32
    return %c0_i32, %c0_i32_0 : i32, i32
  }
  func.func @transform_6(%arg0: i32) -> (i32, i32) {
    %c0_i32 = arith.constant 0 : i32
    %c0_i32_0 = arith.constant 0 : i32
    %c0_i32_1 = arith.constant 0 : i32
    return %c0_i32, %c0_i32_0 : i32, i32
  }
  func.func @transform_7(%arg0: i32) -> (i32, i32) {
    %c0_i32 = arith.constant 0 : i32
    %c0_i32_0 = arith.constant 0 : i32
    return %arg0, %c0_i32 : i32, i32
  }
}

</mosaic_0001>

<llo_original>
// kernel: ode_func_forward.1
$region0: #{ode_func_forward.1}
  #allocation0 [shape = 'u32[]', space=smem, size = 0x4, offset = 0x4, fixed_abs, tag = 'smem constant byte address 0x4 - core index']
  #allocation1 [shape = 'u32[144,128]{1,0:T(1,128)}', space=vmem, size = 0x12000, scoped, tag = 'internal scratch']
  %s0 = inlined_call_operand.vmem [shape: f32[16,128], index: 0, kind: input, shape index: {}]
  %s1 = inlined_call_operand.vmem [shape: f32[128,128], index: 1, kind: input, shape index: {}]
  %s2 = inlined_call_operand.vmem [shape: f32[1,128], index: 2, kind: input, shape index: {}]
  %s3 = inlined_call_operand.vmem [shape: f32[128,128], index: 3, kind: input, shape index: {}]
  %s4 = inlined_call_operand.vmem [shape: f32[1,128], index: 4, kind: input, shape index: {}]
  %s5 = inlined_call_operand.vmem [shape: f32[128,128], index: 5, kind: input, shape index: {}]
  %s6 = inlined_call_operand.vmem [shape: f32[1,128], index: 6, kind: input, shape index: {}]
  %s7 = inlined_call_operand.hbm [shape: f32[16,128], index: 7, kind: output, shape index: {}]
  %s8 = sld [smem:[#allocation0]]
  $region38: #{ode_func_forward.1} parent=0
    _
  %s10 = ssub.s32 1, %s8
  %s11 = scalar_select 0, %s10, %s8
  $region1: #{ode_func_forward.1} parent=0
    #allocation2 [shape = 'u8[8192]{0}', space=vmem, size = 0x2000, scoped, tag = 'output window, operand 0, single buffered']
    #allocation3 [shape = 's32[1]{0}', space=sflag, size = 0x4, scoped, tag = 'scoped memory for ode_func_forward.1']
    %12 = vsyncpa [#allocation3], 0
    // Predicated region
    $region2: #{ode_func_forward.1} parent=1 // pred_check
      _
    $region3: #{ode_func_forward.1} parent=1 // pred_check_branch
      %14 = sbr.rel (0) target = $region5
    $region4: #{ode_func_forward.1} parent=1 // pred_region
      _
    $region5: #{ode_func_forward.1} parent=1 // pred_fallthru
      _
    // Predicated region
    $region6: #{ode_func_forward.1} parent=1 // pred_check
      _
    $region7: #{ode_func_forward.1} parent=1 // pred_check_branch
      %16 = sbr.rel (0) target = $region9
    $region8: #{ode_func_forward.1} parent=1 // pred_region
      _
    $region9: #{ode_func_forward.1} parent=1 // pred_fallthru
      _
    // Predicated region
    $region10: #{ode_func_forward.1} parent=1 // pred_check
      _
    $region11: #{ode_func_forward.1} parent=1 // pred_check_branch
      %18 = sbr.rel (0) target = $region13
    $region12: #{ode_func_forward.1} parent=1 // pred_region
      _
    $region13: #{ode_func_forward.1} parent=1 // pred_fallthru
      _
    // Predicated region
    $region14: #{ode_func_forward.1} parent=1 // pred_check
      _
    $region15: #{ode_func_forward.1} parent=1 // pred_check_branch
      %20 = sbr.rel (0) target = $region17
    $region16: #{ode_func_forward.1} parent=1 // pred_region
      _
    $region17: #{ode_func_forward.1} parent=1 // pred_fallthru
      _
    // Predicated region
    $region18: #{ode_func_forward.1} parent=1 // pred_check
      _
    $region19: #{ode_func_forward.1} parent=1 // pred_check_branch
      %22 = sbr.rel (0) target = $region21
    $region20: #{ode_func_forward.1} parent=1 // pred_region
      _
    $region21: #{ode_func_forward.1} parent=1 // pred_fallthru
      _
    // Predicated region
    $region22: #{ode_func_forward.1} parent=1 // pred_check
      _
    $region23: #{ode_func_forward.1} parent=1 // pred_check_branch
      %24 = sbr.rel (0) target = $region25
    $region24: #{ode_func_forward.1} parent=1 // pred_region
      _
    $region25: #{ode_func_forward.1} parent=1 // pred_fallthru
      _
    // Predicated region
    $region26: #{ode_func_forward.1} parent=1 // pred_check
      _
    $region27: #{ode_func_forward.1} parent=1 // pred_check_branch
      %26 = sbr.rel (0) target = $region29
    $region28: #{ode_func_forward.1} parent=1 // pred_region
      _
    $region29: #{ode_func_forward.1} parent=1 // pred_fallthru
      _
    %v27 = vld [vmem:[%s0] sm:$0xff]
    %v28 = vld [vmem:[%s0 + $0x8] sm:$0xff]
    %v29 = vld [vmem:[%s1] sm:$0xff]
    %v30 = vld [vmem:[%s1 + $0x8] sm:$0xff]
    %v31 = vld [vmem:[%s1 + $0x10] sm:$0xff]
    %v32 = vld [vmem:[%s1 + $0x18] sm:$0xff]
    %v33 = vld [vmem:[%s1 + $0x20] sm:$0xff]
    %v34 = vld [vmem:[%s1 + $0x28] sm:$0xff]
    %v35 = vld [vmem:[%s1 + $0x30] sm:$0xff]
    %v36 = vld [vmem:[%s1 + $0x38] sm:$0xff]
    %v37 = vld [vmem:[%s1 + $0x40] sm:$0xff]
    %v38 = vld [vmem:[%s1 + $0x48] sm:$0xff]
    %v39 = vld [vmem:[%s1 + $0x50] sm:$0xff]
    %v40 = vld [vmem:[%s1 + $0x58] sm:$0xff]
    %v41 = vld [vmem:[%s1 + $0x60] sm:$0xff]
    %v42 = vld [vmem:[%s1 + $0x68] sm:$0xff]
    %v43 = vld [vmem:[%s1 + $0x70] sm:$0xff]
    %v44 = vld [vmem:[%s1 + $0x78] sm:$0xff]
    %v45 = vld [vmem:[%s2] sm:$0x1]
    %v47 = vlaneseq
    %v48 = vshrl.u32 %v47, 7
    %v49 = vsub.s32 0, %v48
    %v50 = vrot.slane %v45, %v49
    %52 = vmatprep.subr.mxu0 0.0
    %53 = vmatpush1.msra.mxu0 %v29
    %54 = vmatprep.subr.mxu0 0.0
    %55 = vmatpush1.msra.mxu0 %v30
    %56 = vmatprep.subr.mxu0 0.0
    %57 = vmatpush1.msra.mxu0 %v31
    %58 = vmatprep.subr.mxu0 0.0
    %59 = vmatpush1.msra.mxu0 %v32
    %60 = vmatprep.subr.mxu0 0.0
    %61 = vmatpush1.msra.mxu0 %v33
    %62 = vmatprep.subr.mxu0 0.0
    %63 = vmatpush1.msra.mxu0 %v34
    %64 = vmatprep.subr.mxu0 0.0
    %65 = vmatpush1.msra.mxu0 %v35
    %66 = vmatprep.subr.mxu0 0.0
    %67 = vmatpush1.msra.mxu0 %v36
    %68 = vmatprep.subr.mxu0 0.0
    %69 = vmatpush1.msra.mxu0 %v37
    %70 = vmatprep.subr.mxu0 0.0
    %71 = vmatpush1.msra.mxu0 %v38
    %72 = vmatprep.subr.mxu0 0.0
    %73 = vmatpush1.msra.mxu0 %v39
    %74 = vmatprep.subr.mxu0 0.0
    %75 = vmatpush1.msra.mxu0 %v40
    %76 = vmatprep.subr.mxu0 0.0
    %77 = vmatpush1.msra.mxu0 %v41
    %78 = vmatprep.subr.mxu0 0.0
    %79 = vmatpush1.msra.mxu0 %v42
    %80 = vmatprep.subr.mxu0 0.0
    %81 = vmatpush1.msra.mxu0 %v43
    %82 = vmatprep.subr.mxu0 0.0
    %83 = vmatpush1.msra.mxu0 %v44
    %84 = vmatprep.subr.mxu0 0.0
    %85 = vmatpush1.msra.mxu0 0.0
    %86 = vmatprep.subr.mxu0 0.0
    %87 = vmatpush1.msra.mxu0 0.0
    %88 = vmatprep.subr.mxu0 0.0
    %89 = vmatpush1.msra.mxu0 0.0
    %90 = vmatprep.subr.mxu0 0.0
    %91 = vmatpush1.msra.mxu0 0.0
    %92 = vmatprep.subr.mxu0 0.0
    %93 = vmatpush1.msra.mxu0 0.0
    %94 = vmatprep.subr.mxu0 0.0
    %95 = vmatpush1.msra.mxu0 0.0
    %96 = vmatprep.subr.mxu0 0.0
    %97 = vmatpush1.msra.mxu0 0.0
    %98 = vmatprep.subr.mxu0 0.0
    %99 = vmatpush1.msra.mxu0 0.0
    %100 = vmatprep.subr.mxu0 0.0
    %101 = vmatpush1.msra.mxu0 0.0
    %102 = vmatprep.subr.mxu0 0.0
    %103 = vmatpush1.msra.mxu0 0.0
    %104 = vmatprep.subr.mxu0 0.0
    %105 = vmatpush1.msra.mxu0 0.0
    %106 = vmatprep.subr.mxu0 0.0
    %107 = vmatpush1.msra.mxu0 0.0
    %108 = vmatprep.subr.mxu0 0.0
    %109 = vmatpush1.msra.mxu0 0.0
    %110 = vmatprep.subr.mxu0 0.0
    %111 = vmatpush1.msra.mxu0 0.0
    %112 = vmatprep.subr.mxu0 0.0
    %113 = vmatpush1.msra.mxu0 0.0
    %114 = vmatprep.subr.mxu0 0.0
    %115 = vmatpush1.msra.mxu0 0.0
    %116 = vmatprep.mubr.f32.mxu0 0.0
    %117 = vmatmul.mubr.f32.gmra.mrb[0].mxu0 %v27
    %v118 = vpop.f32.mrb[0].mxu0
    %v119 = vadd.f32 %v50, %v118
    %v120 = vpop.f32.mrb[0].mxu0
    %121 = vmatprep.mubr.f32.mxu0 0.0
    %122 = vmatmul.mubr.f32.gmra.mrb[0].mxu0 %v28
    %v123 = vpop.f32.mrb[0].mxu0
    %v124 = vadd.f32 %v50, %v123
    %v125 = vpop.f32.mrb[0].mxu0
    %126 = vdwg.mxu0
    %v127 = vtanh.pop %v119
    %v128 = vtanh.pop %v124
    %v129 = vld [vmem:[%s3] sm:$0xff]
    %v130 = vld [vmem:[%s3 + $0x8] sm:$0xff]
    %v131 = vld [vmem:[%s3 + $0x10] sm:$0xff]
    %v132 = vld [vmem:[%s3 + $0x18] sm:$0xff]
    %v133 = vld [vmem:[%s3 + $0x20] sm:$0xff]
    %v134 = vld [vmem:[%s3 + $0x28] sm:$0xff]
    %v135 = vld [vmem:[%s3 + $0x30] sm:$0xff]
    %v136 = vld [vmem:[%s3 + $0x38] sm:$0xff]
    %v137 = vld [vmem:[%s3 + $0x40] sm:$0xff]
    %v138 = vld [vmem:[%s3 + $0x48] sm:$0xff]
    %v139 = vld [vmem:[%s3 + $0x50] sm:$0xff]
    %v140 = vld [vmem:[%s3 + $0x58] sm:$0xff]
    %v141 = vld [vmem:[%s3 + $0x60] sm:$0xff]
    %v142 = vld [vmem:[%s3 + $0x68] sm:$0xff]
    %v143 = vld [vmem:[%s3 + $0x70] sm:$0xff]
    %v144 = vld [vmem:[%s3 + $0x78] sm:$0xff]
    %v145 = vld [vmem:[%s4] sm:$0x1]
    %v147 = vlaneseq
    %v148 = vshrl.u32 %v147, 7
    %v149 = vsub.s32 0, %v148
    %v150 = vrot.slane %v145, %v149
    %152 = vmatprep.subr.mxu0 0.0
    %153 = vmatpush1.msra.mxu0 %v129
    %154 = vmatprep.subr.mxu0 0.0
    %155 = vmatpush1.msra.mxu0 %v130
    %156 = vmatprep.subr.mxu0 0.0
    %157 = vmatpush1.msra.mxu0 %v131
    %158 = vmatprep.subr.mxu0 0.0
    %159 = vmatpush1.msra.mxu0 %v132
    %160 = vmatprep.subr.mxu0 0.0
    %161 = vmatpush1.msra.mxu0 %v133
    %162 = vmatprep.subr.mxu0 0.0
    %163 = vmatpush1.msra.mxu0 %v134
    %164 = vmatprep.subr.mxu0 0.0
    %165 = vmatpush1.msra.mxu0 %v135
    %166 = vmatprep.subr.mxu0 0.0
    %167 = vmatpush1.msra.mxu0 %v136
    %168 = vmatprep.subr.mxu0 0.0
    %169 = vmatpush1.msra.mxu0 %v137
    %170 = vmatprep.subr.mxu0 0.0
    %171 = vmatpush1.msra.mxu0 %v138
    %172 = vmatprep.subr.mxu0 0.0
    %173 = vmatpush1.msra.mxu0 %v139
    %174 = vmatprep.subr.mxu0 0.0
    %175 = vmatpush1.msra.mxu0 %v140
    %176 = vmatprep.subr.mxu0 0.0
    %177 = vmatpush1.msra.mxu0 %v141
    %178 = vmatprep.subr.mxu0 0.0
    %179 = vmatpush1.msra.mxu0 %v142
    %180 = vmatprep.subr.mxu0 0.0
    %181 = vmatpush1.msra.mxu0 %v143
    %182 = vmatprep.subr.mxu0 0.0
    %183 = vmatpush1.msra.mxu0 %v144
    %184 = vmatprep.subr.mxu0 0.0
    %185 = vmatpush1.msra.mxu0 0.0
    %186 = vmatprep.subr.mxu0 0.0
    %187 = vmatpush1.msra.mxu0 0.0
    %188 = vmatprep.subr.mxu0 0.0
    %189 = vmatpush1.msra.mxu0 0.0
    %190 = vmatprep.subr.mxu0 0.0
    %191 = vmatpush1.msra.mxu0 0.0
    %192 = vmatprep.subr.mxu0 0.0
    %193 = vmatpush1.msra.mxu0 0.0
    %194 = vmatprep.subr.mxu0 0.0
    %195 = vmatpush1.msra.mxu0 0.0
    %196 = vmatprep.subr.mxu0 0.0
    %197 = vmatpush1.msra.mxu0 0.0
    %198 = vmatprep.subr.mxu0 0.0
    %199 = vmatpush1.msra.mxu0 0.0
    %200 = vmatprep.subr.mxu0 0.0
    %201 = vmatpush1.msra.mxu0 0.0
    %202 = vmatprep.subr.mxu0 0.0
    %203 = vmatpush1.msra.mxu0 0.0
    %204 = vmatprep.subr.mxu0 0.0
    %205 = vmatpush1.msra.mxu0 0.0
    %206 = vmatprep.subr.mxu0 0.0
    %207 = vmatpush1.msra.mxu0 0.0
    %208 = vmatprep.subr.mxu0 0.0
    %209 = vmatpush1.msra.mxu0 0.0
    %210 = vmatprep.subr.mxu0 0.0
    %211 = vmatpush1.msra.mxu0 0.0
    %212 = vmatprep.subr.mxu0 0.0
    %213 = vmatpush1.msra.mxu0 0.0
    %214 = vmatprep.subr.mxu0 0.0
    %215 = vmatpush1.msra.mxu0 0.0
    %216 = vmatprep.mubr.f32.mxu0 0.0
    %217 = vmatmul.mubr.f32.gmra.mrb[0].mxu0 %v127
    %v218 = vpop.f32.mrb[0].mxu0
    %v219 = vadd.f32 %v150, %v218
    %v220 = vpop.f32.mrb[0].mxu0
    %221 = vmatprep.mubr.f32.mxu0 0.0
    %222 = vmatmul.mubr.f32.gmra.mrb[0].mxu0 %v128
    %v223 = vpop.f32.mrb[0].mxu0
    %v224 = vadd.f32 %v150, %v223
    %v225 = vpop.f32.mrb[0].mxu0
    %226 = vdwg.mxu0
    %v227 = vtanh.pop %v219
    %v228 = vtanh.pop %v224
    %v229 = vld [vmem:[%s5] sm:$0xff]
    %v230 = vld [vmem:[%s5 + $0x8] sm:$0xff]
    %v231 = vld [vmem:[%s5 + $0x10] sm:$0xff]
    %v232 = vld [vmem:[%s5 + $0x18] sm:$0xff]
    %v233 = vld [vmem:[%s5 + $0x20] sm:$0xff]
    %v234 = vld [vmem:[%s5 + $0x28] sm:$0xff]
    %v235 = vld [vmem:[%s5 + $0x30] sm:$0xff]
    %v236 = vld [vmem:[%s5 + $0x38] sm:$0xff]
    %v237 = vld [vmem:[%s5 + $0x40] sm:$0xff]
    %v238 = vld [vmem:[%s5 + $0x48] sm:$0xff]
    %v239 = vld [vmem:[%s5 + $0x50] sm:$0xff]
    %v240 = vld [vmem:[%s5 + $0x58] sm:$0xff]
    %v241 = vld [vmem:[%s5 + $0x60] sm:$0xff]
    %v242 = vld [vmem:[%s5 + $0x68] sm:$0xff]
    %v243 = vld [vmem:[%s5 + $0x70] sm:$0xff]
    %v244 = vld [vmem:[%s5 + $0x78] sm:$0xff]
    %v245 = vld [vmem:[%s6] sm:$0x1]
    %v247 = vlaneseq
    %v248 = vshrl.u32 %v247, 7
    %v249 = vsub.s32 0, %v248
    %v250 = vrot.slane %v245, %v249
    %252 = vmatprep.subr.mxu0 0.0
    %253 = vmatpush1.msra.mxu0 %v229
    %254 = vmatprep.subr.mxu0 0.0
    %255 = vmatpush1.msra.mxu0 %v230
    %256 = vmatprep.subr.mxu0 0.0
    %257 = vmatpush1.msra.mxu0 %v231
    %258 = vmatprep.subr.mxu0 0.0
    %259 = vmatpush1.msra.mxu0 %v232
    %260 = vmatprep.subr.mxu0 0.0
    %261 = vmatpush1.msra.mxu0 %v233
    %262 = vmatprep.subr.mxu0 0.0
    %263 = vmatpush1.msra.mxu0 %v234
    %264 = vmatprep.subr.mxu0 0.0
    %265 = vmatpush1.msra.mxu0 %v235
    %266 = vmatprep.subr.mxu0 0.0
    %267 = vmatpush1.msra.mxu0 %v236
    %268 = vmatprep.subr.mxu0 0.0
    %269 = vmatpush1.msra.mxu0 %v237
    %270 = vmatprep.subr.mxu0 0.0
    %271 = vmatpush1.msra.mxu0 %v238
    %272 = vmatprep.subr.mxu0 0.0
    %273 = vmatpush1.msra.mxu0 %v239
    %274 = vmatprep.subr.mxu0 0.0
    %275 = vmatpush1.msra.mxu0 %v240
    %276 = vmatprep.subr.mxu0 0.0
    %277 = vmatpush1.msra.mxu0 %v241
    %278 = vmatprep.subr.mxu0 0.0
    %279 = vmatpush1.msra.mxu0 %v242
    %280 = vmatprep.subr.mxu0 0.0
    %281 = vmatpush1.msra.mxu0 %v243
    %282 = vmatprep.subr.mxu0 0.0
    %283 = vmatpush1.msra.mxu0 %v244
    %284 = vmatprep.subr.mxu0 0.0
    %285 = vmatpush1.msra.mxu0 0.0
    %286 = vmatprep.subr.mxu0 0.0
    %287 = vmatpush1.msra.mxu0 0.0
    %288 = vmatprep.subr.mxu0 0.0
    %289 = vmatpush1.msra.mxu0 0.0
    %290 = vmatprep.subr.mxu0 0.0
    %291 = vmatpush1.msra.mxu0 0.0
    %292 = vmatprep.subr.mxu0 0.0
    %293 = vmatpush1.msra.mxu0 0.0
    %294 = vmatprep.subr.mxu0 0.0
    %295 = vmatpush1.msra.mxu0 0.0
    %296 = vmatprep.subr.mxu0 0.0
    %297 = vmatpush1.msra.mxu0 0.0
    %298 = vmatprep.subr.mxu0 0.0
    %299 = vmatpush1.msra.mxu0 0.0
    %300 = vmatprep.subr.mxu0 0.0
    %301 = vmatpush1.msra.mxu0 0.0
    %302 = vmatprep.subr.mxu0 0.0
    %303 = vmatpush1.msra.mxu0 0.0
    %304 = vmatprep.subr.mxu0 0.0
    %305 = vmatpush1.msra.mxu0 0.0
    %306 = vmatprep.subr.mxu0 0.0
    %307 = vmatpush1.msra.mxu0 0.0
    %308 = vmatprep.subr.mxu0 0.0
    %309 = vmatpush1.msra.mxu0 0.0
    %310 = vmatprep.subr.mxu0 0.0
    %311 = vmatpush1.msra.mxu0 0.0
    %312 = vmatprep.subr.mxu0 0.0
    %313 = vmatpush1.msra.mxu0 0.0
    %314 = vmatprep.subr.mxu0 0.0
    %315 = vmatpush1.msra.mxu0 0.0
    %316 = vmatprep.mubr.f32.mxu0 0.0
    %317 = vmatmul.mubr.f32.gmra.mrb[0].mxu0 %v227
    %v318 = vpop.f32.mrb[0].mxu0
    %v319 = vadd.f32 %v250, %v318
    %v320 = vpop.f32.mrb[0].mxu0
    %321 = vmatprep.mubr.f32.mxu0 0.0
    %322 = vmatmul.mubr.f32.gmra.mrb[0].mxu0 %v228
    %v323 = vpop.f32.mrb[0].mxu0
    %v324 = vadd.f32 %v250, %v323
    %v325 = vpop.f32.mrb[0].mxu0
    %326 = vdwg.mxu0
    %327 = vst [vmem:[#allocation2] sm:$0xff] %v319
    %328 = vst [vmem:[#allocation2 + $0x8] sm:$0xff] %v324
    // Predicated region
    $region30: #{ode_func_forward.1} parent=1 // pred_check
      _
    $region31: #{ode_func_forward.1} parent=1 // pred_check_branch
      %330 = sbr.rel (0) target = $region33
    $region32: #{ode_func_forward.1} parent=1 // pred_region
      %s332 = ssub.s32 256, 256
      %333 = vsyncadd [#allocation3], %s332
      %s334 = sshll.u32 [#allocation2], 4
      %s335 = int_to_ptr.vmem [resolvable:$true] %s334
      %340 = dma.vmem_to_hbm [thread:$0]  %s335, 256, %s7, [#allocation3], 128, 128, 8
    $region33: #{ode_func_forward.1} parent=1 // pred_fallthru
      _
    // Predicated region
    $region34: #{ode_func_forward.1} parent=1 // pred_check
      _
    $region35: #{ode_func_forward.1} parent=1 // pred_check_branch
      %342 = sbr.rel (0) target = $region37
    $region36: #{ode_func_forward.1} parent=1 // pred_region
      %343 = dma.done [#allocation3], 256
    $region37: #{ode_func_forward.1} parent=1 // pred_fallthru
      _
    %344 = vsyncpa [#allocation3], 1

</llo_original>
